<compile_context>
chip_gen: v6e
topology: v6e:2x2x1
jax: 0.10.0
libtpu: 0.0.40
codegen_flags: <defaults>
</compile_context>

<pallas_src>
import numpy as np
import jax
import jax.numpy as jnp
from jax.experimental import pallas as pl
from jax.experimental.pallas import tpu as pltpu


# ----------------------------------------------------------------------------
# Fused kernel: out = x @ W_t + b ; thr = sum(out)/N ; gt = (mask > thr)
# ----------------------------------------------------------------------------
def fused_linear_mask_kernel(x_ref, w_ref, b_ref, mask_ref, out_ref, gt_ref):
    # bf16 operands -> single-pass MXU; accumulate in f32.
    out = jnp.dot(x_ref[...], w_ref[...], preferred_element_type=jnp.float32)
    out = out + b_ref[...]                      # f32 epilogue (v5e-safe)
    out_ref[...] = out
    # threshold = out.sum(dim=1).mean() == sum(out) / N
    # (constant multiply instead of divide; reduce goes through the XLU slot)
    thr = jnp.sum(out) * jnp.float32(1.0 / out.shape[0])
    # Compare on the mask tile; emit int32 0/1 for the device-side nonzero.
    gt_ref[...] = (mask_ref[...] > thr).astype(jnp.int32)


def _build_forward(n, in_dim, out_dim, mask_shape):
    mask_size = int(np.prod(mask_shape))

    @jax.jit
    def fwd(x, mask, w_t_bf16, b):
        # Cast activations to bf16 once per call, inside the jit.
        x_bf16 = x.astype(jnp.bfloat16)
        out, gt = pl.pallas_call(
            fused_linear_mask_kernel,
            out_shape=(
                jax.ShapeDtypeStruct((n, out_dim), jnp.float32),
                jax.ShapeDtypeStruct(mask_shape, jnp.int32),
            ),
            in_specs=[
                pl.BlockSpec(memory_space=pltpu.MemorySpace.VMEM),  # x (bf16)
                pl.BlockSpec(memory_space=pltpu.MemorySpace.VMEM),  # W_t (bf16)
                pl.BlockSpec(memory_space=pltpu.MemorySpace.VMEM),  # bias (f32)
                pl.BlockSpec(memory_space=pltpu.MemorySpace.VMEM),  # mask (f32)
            ],
            out_specs=(
                pl.BlockSpec(memory_space=pltpu.MemorySpace.VMEM),
                pl.BlockSpec(memory_space=pltpu.MemorySpace.VMEM),
            ),
        )(x_bf16, w_t_bf16, b, mask)

        # Device-side, static-shape index extraction. jnp.nonzero on a 2-D
        # array enumerates in C order, matching np.argwhere exactly.
        rows, cols = jnp.nonzero(gt > 0, size=mask_size, fill_value=-1)
        idx_padded = jnp.stack([rows, cols], axis=-1).astype(jnp.int32)
        count = jnp.sum(gt)
        return out, idx_padded, count

    return fwd


def my_module_forward(fwd, x, mask, w_t_bf16, b):
    out, idx_padded, count = fwd(x, mask, w_t_bf16, b)
    # The only synchronous D2H is this single scalar (argwhere's output shape
    # is data-dependent, same as the PyTorch reference's .cpu() round-trip).
    n_hits = int(count)
    idx = idx_padded[:n_hits]       # device-side slice; idx stays on device
    return out, idx


if __name__ == "__main__":
    # Small shapes consistent with nn.Linear(in_dim, out_dim)
    N, in_dim, out_dim = 8, 32, 16
    mask_shape = (8, 16)

    key = jax.random.PRNGKey(0)
    kx, km, kw, kb = jax.random.split(key, 4)

    x = jax.random.normal(kx, (N, in_dim), dtype=jnp.float32)
    mask = jax.random.normal(km, mask_shape, dtype=jnp.float32)

    # Deterministic parameter init (mimics nn.Linear uniform init bounds)
    bound = 1.0 / np.sqrt(in_dim)
    weight = jax.random.uniform(kw, (out_dim, in_dim), jnp.float32, -bound, bound)
    bias = jax.random.uniform(kb, (1, out_dim), jnp.float32, -bound, bound)

    # Resident device params: bf16 MXU operands prepared once, not per call.
    w_t_bf16 = jax.device_put(weight.T.astype(jnp.bfloat16))   # [in_dim, out_dim]
    bias_dev = jax.device_put(bias)
    x_dev = jax.device_put(x)
    mask_dev = jax.device_put(mask)

    fwd = _build_forward(N, in_dim, out_dim, mask_shape)
    out, idx = my_module_forward(fwd, x_dev, mask_dev, w_t_bf16, bias_dev)
    jax.block_until_ready(out)
    jax.block_until_ready(idx)

    # ---- Sanity checks ------------------------------------------------------
    # Reference with the same bf16 MXU operands / f32 accumulation.
    ref_out = (
        jnp.dot(x.astype(jnp.bfloat16), w_t_bf16, preferred_element_type=jnp.float32)
        + bias
    )
    ref_thr = float(jnp.sum(ref_out) * (1.0 / N))
    ref_idx = np.argwhere(np.asarray(mask) > ref_thr).astype(np.int32)

    assert np.allclose(np.asarray(out), np.asarray(ref_out), atol=1e-4, rtol=1e-4)
    # Also close to the exact f32 module output (bf16 operand rounding only).
    full_ref = np.asarray(x @ weight.T + bias)
    assert np.allclose(np.asarray(out), full_ref, atol=1e-1, rtol=1e-1)
    assert np.array_equal(np.asarray(idx), ref_idx)

    print("KERNEL_OK")
</pallas_src>

<mosaic_0001>
module attributes {stable_mosaic.version = 11 : i64} {
  func.func private @main(%arg0: i32) attributes {dimension_semantics = [#tpu.dimension_semantics<core_parallel>], iteration_bounds = array<i64: 2>, tpu.core_type = #tpu.core_type<sc_scalar_subcore>, window_params = []} {
    return
  }
}

module attributes {stable_mosaic.version = 11 : i64} {
  func.func private @main(%arg0: i32) attributes {dimension_semantics = [#tpu.dimension_semantics<core_parallel>], iteration_bounds = array<i64: 2>, tpu.core_type = #tpu.core_type<sc_scalar_subcore>, window_params = []} {
    return
  }
}

module attributes {stable_mosaic.version = 11 : i64} {
  func.func @fused_linear_mask_kernel(%arg0: memref<8x32xbf16, #tpu.memory_space<vmem>>, %arg1: memref<32x16xbf16, #tpu.memory_space<vmem>>, %arg2: memref<1x16xf32, #tpu.memory_space<vmem>>, %arg3: memref<8x16xf32, #tpu.memory_space<vmem>>, %arg4: memref<8x16xf32, #tpu.memory_space<vmem>>, %arg5: memref<8x16xi32, #tpu.memory_space<vmem>>) attributes {dimension_semantics = [], scalar_prefetch = 0 : i64, scratch_operands = 0 : i64, tpu.core_type = #tpu.core_type<tc>} {
    %c0 = arith.constant 0 : index
    %c0_0 = arith.constant 0 : index
    %0 = vector.load %arg0[%c0, %c0_0] : memref<8x32xbf16, #tpu.memory_space<vmem>>, vector<8x32xbf16>
    %c0_1 = arith.constant 0 : index
    %c0_2 = arith.constant 0 : index
    %1 = vector.load %arg1[%c0_1, %c0_2] : memref<32x16xbf16, #tpu.memory_space<vmem>>, vector<32x16xbf16>
    %cst = arith.constant dense<0.000000e+00> : vector<8x16xf32>
    %2 = tpu.matmul %0, %1, %cst {dimension_numbers = #tpu.dot_dimension_numbers<[1], [0], [0], [1], [0, 0, 1, 1], [], []>} : vector<8x32xbf16>, vector<32x16xbf16>, vector<8x16xf32> -> vector<8x16xf32>
    %c0_3 = arith.constant 0 : index
    %c0_4 = arith.constant 0 : index
    %3 = vector.load %arg2[%c0_3, %c0_4] : memref<1x16xf32, #tpu.memory_space<vmem>>, vector<1x16xf32>
    %4 = vector.broadcast %3 : vector<1x16xf32> to vector<8x16xf32>
    %5 = arith.addf %2, %4 : vector<8x16xf32>
    %c0_5 = arith.constant 0 : index
    %c0_6 = arith.constant 0 : index
    %6 = vector.load %arg4[%c0_5, %c0_6] : memref<8x16xf32, #tpu.memory_space<vmem>>, vector<8x16xf32>
    tpu.vector_store %arg4[%c0_5, %c0_6], %5 {strides = array<i32>} : memref<8x16xf32, #tpu.memory_space<vmem>>, vector<8x16xf32>,
    %7 = vector.shape_cast %5 : vector<8x16xf32> to vector<1x8x16xf32>
    %cst_7 = arith.constant dense<0.000000e+00> : vector<1xf32>
    %8 = vector.multi_reduction <add>, %7, %cst_7 [1, 2] : vector<1x8x16xf32> to vector<1xf32>
    %9 = vector.shape_cast %8 : vector<1xf32> to vector<1x1x1xf32>
    %10 = vector.extract %9[0, 0, 0] : f32 from vector<1x1x1xf32>
    %cst_8 = arith.constant 1.250000e-01 : f32
    %11 = arith.mulf %10, %cst_8 : f32
    %c0_9 = arith.constant 0 : index
    %c0_10 = arith.constant 0 : index
    %12 = vector.load %arg3[%c0_9, %c0_10] : memref<8x16xf32, #tpu.memory_space<vmem>>, vector<8x16xf32>
    %13 = vector.broadcast %11 : f32 to vector<8x16xf32>
    %14 = arith.cmpf ogt, %12, %13 : vector<8x16xf32>
    %15 = arith.extui %14 : vector<8x16xi1> to vector<8x16xi32>
    %c0_11 = arith.constant 0 : index
    %c0_12 = arith.constant 0 : index
    %16 = vector.load %arg5[%c0_11, %c0_12] : memref<8x16xi32, #tpu.memory_space<vmem>>, vector<8x16xi32>
    tpu.vector_store %arg5[%c0_11, %c0_12], %15 {strides = array<i32>} : memref<8x16xi32, #tpu.memory_space<vmem>>, vector<8x16xi32>,
    return
  }
}

</mosaic_0001>

<llo_original>
// kernel: fwd.1
$region0: #{fwd.1}
  #allocation0 [shape = 'u32[]', space=smem, size = 0x4, offset = 0x4, fixed_abs, tag = 'smem constant byte address 0x4 - core index']
  #allocation1 [shape = 'u32[144,128]{1,0:T(1,128)}', space=vmem, size = 0x12000, scoped, tag = 'internal scratch']
  %s0 = inlined_call_operand.vmem [shape: bf16[8,32], index: 0, kind: input, shape index: {}]
  %s1 = inlined_call_operand.vmem [shape: bf16[32,16], index: 1, kind: input, shape index: {}]
  %s2 = inlined_call_operand.vmem [shape: f32[1,16], index: 2, kind: input, shape index: {}]
  %s3 = inlined_call_operand.vmem [shape: f32[8,16], index: 3, kind: input, shape index: {}]
  %s4 = inlined_call_operand.hbm [shape: f32[8,16], index: 4, kind: output, shape index: {0}]
  %s5 = inlined_call_operand.vmem [shape: s32[8,16], index: 5, kind: output, shape index: {1}]
  %6 = xla_tuple %s4, %s5
  %s7 = sld [smem:[#allocation0]]
  $region34: #{fwd.1} parent=0
    _
  %s9 = ssub.s32 1, %s7
  %s10 = scalar_select 0, %s9, %s7
  $region1: #{fwd.1} parent=0
    #allocation2 [shape = 'u8[4096]{0}', space=vmem, size = 0x1000, scoped, tag = 'output window, operand 0, single buffered']
    #allocation3 [shape = 's32[1]{0}', space=sflag, size = 0x4, scoped, tag = 'scoped memory for fwd.1']
    %11 = vsyncpa [#allocation3], 0
    // Predicated region
    $region2: #{fwd.1} parent=1 // pred_check
      _
    $region3: #{fwd.1} parent=1 // pred_check_branch
      %13 = sbr.rel (0) target = $region5
    $region4: #{fwd.1} parent=1 // pred_region
      _
    $region5: #{fwd.1} parent=1 // pred_fallthru
      _
    // Predicated region
    $region6: #{fwd.1} parent=1 // pred_check
      _
    $region7: #{fwd.1} parent=1 // pred_check_branch
      %15 = sbr.rel (0) target = $region9
    $region8: #{fwd.1} parent=1 // pred_region
      _
    $region9: #{fwd.1} parent=1 // pred_fallthru
      _
    // Predicated region
    $region10: #{fwd.1} parent=1 // pred_check
      _
    $region11: #{fwd.1} parent=1 // pred_check_branch
      %17 = sbr.rel (0) target = $region13
    $region12: #{fwd.1} parent=1 // pred_region
      _
    $region13: #{fwd.1} parent=1 // pred_fallthru
      _
    // Predicated region
    $region14: #{fwd.1} parent=1 // pred_check
      _
    $region15: #{fwd.1} parent=1 // pred_check_branch
      %19 = sbr.rel (0) target = $region17
    $region16: #{fwd.1} parent=1 // pred_region
      _
    $region17: #{fwd.1} parent=1 // pred_fallthru
      _
    %v21 = vld [vmem:[%s0] sm:$0xf]
    %v22 = vld [vmem:[%s1] sm:$0xf]
    %v23 = vld [vmem:[%s1 + $0x4] sm:$0xf]
    %v24 = vld [vmem:[%s1 + $0x8] sm:$0xf]
    %v25 = vld [vmem:[%s1 + $0xc] sm:$0xf]
    %v26 = vld [vmem:[%s2] sm:$0x1]
    %v28 = vlaneseq
    %v29 = vshrl.u32 %v28, 7
    %v30 = vsub.s32 0, %v29
    %v31 = vrot.slane %v26, %v30
    %v37 = vunpack.c.l.b16 %v22
    %v38 = vunpack.c.l.b16 %v23
    %v39 = vunpack.c.l.b16 %v24
    %v40 = vunpack.c.l.b16 %v25
    %v41 = vpack.c.b16 %v38, %v37
    %v42 = vpack.c.b16 %v40, %v39
    %vm45 = vcmask 261120
    %v47 = vsel %vm45, %v21, 0
    %49 = vmatprep.subr.bf16.mxu0 0
    %50 = vmatpush1.bf16.msra.mxu0 0
    %51 = vmatprep.subr.bf16.mxu0 0
    %52 = vmatpush1.bf16.msra.mxu0 0
    %53 = vmatprep.subr.bf16.mxu0 0
    %54 = vmatpush1.bf16.msra.mxu0 0
    %55 = vmatprep.subr.bf16.mxu0 0
    %56 = vmatpush1.bf16.msra.mxu0 0
    %57 = vmatprep.subr.bf16.mxu0 0
    %58 = vmatpush1.bf16.msra.mxu0 0
    %59 = vmatprep.subr.bf16.mxu0 0
    %60 = vmatpush1.bf16.msra.mxu0 0
    %61 = vmatprep.subr.bf16.mxu0 0
    %62 = vmatpush1.bf16.msra.mxu0 %v42
    %63 = vmatprep.subr.bf16.mxu0 0
    %64 = vmatpush1.bf16.msra.mxu0 %v41
    %65 = vmatprep.subr.bf16.mxu0 0
    %66 = vmatpush2.bf16.msra.mxu0 0
    %67 = vmatprep.subr.bf16.mxu0 0
    %68 = vmatpush2.bf16.msra.mxu0 0
    %69 = vmatprep.subr.bf16.mxu0 0
    %70 = vmatpush2.bf16.msra.mxu0 0
    %71 = vmatprep.subr.bf16.mxu0 0
    %72 = vmatpush2.bf16.msra.mxu0 0
    %73 = vmatprep.subr.bf16.mxu0 0
    %74 = vmatpush2.bf16.msra.mxu0 0
    %75 = vmatprep.subr.bf16.mxu0 0
    %76 = vmatpush2.bf16.msra.mxu0 0
    %77 = vmatprep.subr.bf16.mxu0 0
    %78 = vmatpush2.bf16.msra.mxu0 0
    %79 = vmatprep.subr.bf16.mxu0 0
    %80 = vmatpush2.bf16.msra.mxu0 0
    %81 = vmatprep.mubr.bf16.mxu0 0
    %82 = vmatmul.mubr.bf16.gmra.mxu0 %v47
    %v83 = vpop.f32.mrf.mxu0
    %v84 = vadd.f32 %v31, %v83
    %v85 = vpop.f32.mrf.mxu0
    %v86 = vpop.f32.mrf.mxu0
    %v87 = vpop.f32.mrf.mxu0
    %88 = vdwg.mxu0
    %vm89 = vcmask 130048
    %90 = vst.msk [vmem:[#allocation2] sm:$0xff] %vm89, %v84
    %v91 = vsel %vm89, %v84, 0.0
    %92 = vadd.xlane.f32.xlu0 %v91
    %v93 = vpop.xlane.xlu0 %92
    %v94 = vrot.slane %v93, 4
    %v95 = vadd.f32 %v93, %v94
    %v96 = vrot.slane %v95, 2
    %v97 = vadd.f32 %v95, %v96
    %v98 = vrot.slane %v97, 1
    %v99 = vadd.f32 %v97, %v98
    %s100 = vtos %v99
    %s101 = smul.f32 %s100, 0.125
    %v102 = vld [vmem:[%s3] sm:$0xff]
    %v103 = vstv %s101
    %vm104 = vcmp.gt.f32.partialorder %v102, %v103
    %v105 = vsel %vm104, 1, 0
    %106 = vst.msk [vmem:[%s5] sm:$0xff] %vm89, %v105
    // Predicated region
    $region18: #{fwd.1} parent=1 // pred_check
      _
    $region19: #{fwd.1} parent=1 // pred_check_branch
      %108 = sbr.rel (0) target = $region21
    $region20: #{fwd.1} parent=1 // pred_region
      %s110 = ssub.s32 128, 128
      %111 = vsyncadd [#allocation3], %s110
      %s113 = sshll.u32 [#allocation2], 4
      %s114 = int_to_ptr.vmem [resolvable:$true] %s113
      %116 = dma.vmem_to_hbm [thread:$0]  %s114, 128, %s4, [#allocation3]
    $region21: #{fwd.1} parent=1 // pred_fallthru
      _
    // Predicated region
    $region22: #{fwd.1} parent=1 // pred_check
      _
    $region23: #{fwd.1} parent=1 // pred_check_branch
      %118 = sbr.rel (0) target = $region25
    $region24: #{fwd.1} parent=1 // pred_region
      _
    $region25: #{fwd.1} parent=1 // pred_fallthru
      _
    // Predicated region
    $region26: #{fwd.1} parent=1 // pred_check
      _
    $region27: #{fwd.1} parent=1 // pred_check_branch
      %120 = sbr.rel (0) target = $region29
    $region28: #{fwd.1} parent=1 // pred_region
      %121 = dma.done [#allocation3], 128
    $region29: #{fwd.1} parent=1 // pred_fallthru
      _
    // Predicated region
    $region30: #{fwd.1} parent=1 // pred_check
      _
    $region31: #{fwd.1} parent=1 // pred_check_branch
      %123 = sbr.rel (0) target = $region33
    $region32: #{fwd.1} parent=1 // pred_region
      _
    $region33: #{fwd.1} parent=1 // pred_fallthru
      _
    %124 = vsyncpa [#allocation3], 1

</llo_original>
